<compile_context>
chip_gen: v7x
topology: tpu7x:2x2x1
jax: 0.10.0
libtpu: 0.0.40
codegen_flags: <defaults>
</compile_context>

<pallas_src>
import functools
import math

import jax
import jax.numpy as jnp
from jax.experimental import pallas as pl
from jax.experimental.pallas import tpu as pltpu


def _round_up(x, m):
    return (x + m - 1) // m * m


def _cdiv(a, b):
    return -(-a // b)


def _pick_tile(padded_dim, max_tile, align=128):
    """Largest multiple of `align` <= max_tile that divides padded_dim."""
    t = max(min(max_tile, padded_dim) // align * align, align)
    while padded_dim % t:
        t -= align
    return t


def _pick_tm(batch, tm_max, sublane=16, megacore_split_threshold=256):
    """Batch tile: multiple of 16 (bf16 sublane packing), minimal padding, and
    >=2 i-tiles when the batch is big enough (keeps v7x's 2nd TC busy)."""
    n_tiles = max(_cdiv(batch, tm_max), 1)
    if n_tiles == 1 and _round_up(batch, sublane) >= megacore_split_threshold:
        n_tiles = 2
    tm = _round_up(_cdiv(batch, n_tiles), sublane)
    return tm, n_tiles * tm  # (tile_m, padded batch)


def popart_kernel(task_ref, x_ref, wt_ref, b_ref, sigma_ref, mu_ref,
                  out_ref, norm_ref):
    """One (tm, tn) output tile. Grid = (M, N, K); K is the reduction axis.

    norm_ref (f32) is the accumulator: its index_map ignores k, so the block
    stays resident in VMEM across the whole k loop — no extra scratch buffer.
    """
    del task_ref  # task selection happens in the BlockSpec index_maps
    k = pl.program_id(2)

    @pl.when(k == 0)
    def _init():
        norm_ref[...] = jnp.zeros_like(norm_ref)

    # MXU: bf16 x bf16 -> f32 accumulate.  wt_ref is (1, tk, tn); [0] -> (tk, tn).
    norm_ref[...] += jnp.dot(x_ref[...], wt_ref[0],
                             preferred_element_type=jnp.float32)

    @pl.when(k == pl.num_programs(2) - 1)
    def _finalize():
        norm = norm_ref[...] + b_ref[0]          # (1, tn) broadcasts lane-wise
        norm_ref[...] = norm
        out_ref[...] = (norm * sigma_ref[0] + mu_ref[0]).astype(out_ref.dtype)


def prepare_popart_params(weight_t, bias, mu, sigma, *, use_bf16=True):
    """One-time cast + pad of the per-task parameters (call once at init).

    weight_t: [n_tasks, I, O] (already transposed); bias/mu/sigma: [n_tasks, O].
    Pads I and O up to multiples of 128 so the forward only has to pad x.
    """
    n_tasks, I, O = weight_t.shape
    Ip = _round_up(I, 128)
    Op = _round_up(O, 128)
    in_dtype = jnp.bfloat16 if use_bf16 else jnp.float32
    wp = jnp.pad(weight_t.astype(in_dtype), ((0, 0), (0, Ip - I), (0, Op - O)))
    # [n_tasks, 1, Op]: per-task row block is (1, 1, tn) — constraint-safe and
    # broadcast-ready inside the kernel.
    bp = jnp.pad(bias.astype(jnp.float32), ((0, 0), (0, Op - O)))[:, None, :]
    sp = jnp.pad(sigma.astype(jnp.float32), ((0, 0), (0, Op - O)))[:, None, :]
    mp = jnp.pad(mu.astype(jnp.float32), ((0, 0), (0, Op - O)))[:, None, :]
    return wp, bp, sp, mp


@functools.partial(jax.jit,
                   static_argnames=("out_features", "tm_max", "tn_max",
                                    "tk_max", "out_dtype"))
def popart_forward(x, weight_p, bias_p, sigma_p, mu_p, task_idx, *,
                   out_features, tm_max=512, tn_max=512, tk_max=1024,
                   out_dtype=jnp.float32):
    """x: [B, I]; weight_p/bias_p/sigma_p/mu_p from prepare_popart_params().

    Returns (output, normalized_output), both [B, out_features] — matching the
    PyTorch forward(inputs, map_name) return [output, normalized_output].
    `normalized_output` is always float32 (it is the matmul accumulator).
    """
    B, I = x.shape
    n_tasks, Ip, Op = weight_p.shape
    assert Ip % 128 == 0 and Op % 128 == 0, "use prepare_popart_params()"
    assert I <= Ip and out_features <= Op

    tn = _pick_tile(Op, tn_max)
    tk = _pick_tile(Ip, tk_max)
    tm, Bp = _pick_tm(B, tm_max)

    in_dtype = weight_p.dtype
    xp = jnp.pad(x.astype(in_dtype), ((0, Bp - B), (0, Ip - I)))
    task = jnp.asarray(task_idx, jnp.int32).reshape((1,))

    grid = (Bp // tm, Op // tn, Ip // tk)

    in_bytes = jnp.dtype(in_dtype).itemsize
    out_bytes = jnp.dtype(out_dtype).itemsize
    cost = pl.CostEstimate(
        flops=2 * Bp * Ip * Op + 3 * Bp * Op,
        transcendentals=0,
        bytes_accessed=(Bp * Ip * in_bytes) * (Op // tn)   # x re-read per j tile
        + (Ip * Op * in_bytes) * (Bp // tm)                 # W re-read per i tile
        + Bp * Op * (4 + out_bytes)                         # norm (f32) + output
        + 3 * Op * 4 * (Bp // tm),                          # bias / sigma / mu
    )

    out_p, norm_p = pl.pallas_call(
        popart_kernel,
        out_shape=(
            jax.ShapeDtypeStruct((Bp, Op), out_dtype),      # de-normalized output
            jax.ShapeDtypeStruct((Bp, Op), jnp.float32),    # normalized (accumulator)
        ),
        grid_spec=pltpu.PrefetchScalarGridSpec(
            num_scalar_prefetch=1,   # task index -> SMEM, visible to index_maps
            grid=grid,
            in_specs=[
                pl.BlockSpec((tm, tk), lambda i, j, k, t: (i, k)),           # x
                pl.BlockSpec((1, tk, tn), lambda i, j, k, t: (t[0], k, j)),  # W_t[task]
                pl.BlockSpec((1, 1, tn), lambda i, j, k, t: (t[0], 0, j)),   # bias[task]
                pl.BlockSpec((1, 1, tn), lambda i, j, k, t: (t[0], 0, j)),   # sigma[task]
                pl.BlockSpec((1, 1, tn), lambda i, j, k, t: (t[0], 0, j)),   # mu[task]
            ],
            out_specs=[
                pl.BlockSpec((tm, tn), lambda i, j, k, t: (i, j)),
                pl.BlockSpec((tm, tn), lambda i, j, k, t: (i, j)),
            ],
        ),
        compiler_params=pltpu.CompilerParams(
            dimension_semantics=("parallel", "parallel", "arbitrary"),
            vmem_limit_bytes=32 * 1024 * 1024,   # safe on v5e/v6e/v7x (64 MiB phys)
        ),
        cost_estimate=cost,
    )(task, xp, weight_p, bias_p, sigma_p, mu_p)

    if Bp != B or Op != out_features:
        out_p = out_p[:B, :out_features]
        norm_p = norm_p[:B, :out_features]
    return out_p, norm_p


def init_popart_params(key, input_features, output_features, n_tasks=1):
    """PopArtLayer.reset_parameters, weight stored pre-transposed as [n_tasks, I, O]."""
    keys = jax.random.split(key, 2 * n_tasks)
    fan_in = input_features
    bound = 1.0 / math.sqrt(fan_in)  # kaiming_uniform_(a=sqrt(5)) -> 1/sqrt(fan_in)
    weights_t, biases = [], []
    for t in range(n_tasks):
        w = jax.random.uniform(keys[2 * t], (output_features, input_features),
                               jnp.float32, -bound, bound)
        b = jax.random.uniform(keys[2 * t + 1], (output_features,),
                               jnp.float32, -bound, bound)
        weights_t.append(w.T)   # one-time transpose at init: stored [I, O]
        biases.append(b)
    weight_t = jnp.stack(weights_t)                         # [n_tasks, I, O]
    bias = jnp.stack(biases)                                # [n_tasks, O]
    mu = jnp.zeros((n_tasks, output_features), jnp.float32)
    sigma = jnp.ones((n_tasks, output_features), jnp.float32)
    return weight_t, bias, mu, sigma


if __name__ == "__main__":
    key = jax.random.PRNGKey(0)
    k_x, k_p, k_mu, k_sig = jax.random.split(key, 4)

    batch, input_features, output_features = 8, 32, 16
    n_tasks, task_idx = 2, 1

    weight_t, bias, mu, sigma = init_popart_params(
        k_p, input_features, output_features, n_tasks)
    # Pretend some update_parameters() steps happened so the affine is non-trivial.
    mu = 0.1 * jax.random.normal(k_mu, mu.shape, jnp.float32)
    sigma = 1.0 + 0.5 * jnp.abs(jax.random.normal(k_sig, sigma.shape, jnp.float32))

    x = jax.random.normal(k_x, (batch, input_features), jnp.float32)

    # One-time parameter preparation (cast + pad); the forward only pads x.
    wp, bp, sp, mp = prepare_popart_params(weight_t, bias, mu, sigma, use_bf16=True)
    out, norm = popart_forward(x, wp, bp, sp, mp, task_idx,
                               out_features=output_features)
    jax.block_until_ready((out, norm))

    # Plain-JAX f32 reference.
    norm_ref = x @ weight_t[task_idx] + bias[task_idx][None, :]
    out_ref = norm_ref * sigma[task_idx][None, :] + mu[task_idx][None, :]

    # bf16 MXU operands -> loose tolerance vs the f32 reference.
    assert jnp.allclose(norm, norm_ref, atol=5e-2, rtol=5e-2)
    assert jnp.allclose(out, out_ref, atol=5e-2, rtol=5e-2)
    # The de-normalization affine itself is exact in f32.
    assert jnp.allclose(out, norm * sigma[task_idx] + mu[task_idx],
                        atol=1e-5, rtol=1e-5)

    # Exactness check with f32 MXU operands.
    wp32, bp32, sp32, mp32 = prepare_popart_params(weight_t, bias, mu, sigma,
                                                   use_bf16=False)
    out32, norm32 = popart_forward(x, wp32, bp32, sp32, mp32, task_idx,
                                   out_features=output_features)
    jax.block_until_ready((out32, norm32))
    assert jnp.allclose(norm32, norm_ref, atol=1e-5, rtol=1e-5)
    assert jnp.allclose(out32, out_ref, atol=1e-5, rtol=1e-5)

    print("KERNEL_OK")
</pallas_src>

<mosaic_0001>
module attributes {stable_mosaic.version = 11 : i64} {
  func.func @popart_kernel(%arg0: i32, %arg1: i32, %arg2: i32, %arg3: memref<1xi32, #tpu.memory_space<smem>>, %arg4: memref<16x128xbf16, #tpu.memory_space<vmem>>, %arg5: memref<1x128x128xbf16, #tpu.memory_space<vmem>>, %arg6: memref<1x1x128xf32, #tpu.memory_space<vmem>>, %arg7: memref<1x1x128xf32, #tpu.memory_space<vmem>>, %arg8: memref<1x1x128xf32, #tpu.memory_space<vmem>>, %arg9: memref<16x128xf32, #tpu.memory_space<vmem>>, %arg10: memref<16x128xf32, #tpu.memory_space<vmem>>) attributes {dimension_semantics = [#tpu.dimension_semantics<parallel>, #tpu.dimension_semantics<parallel>, #tpu.dimension_semantics<arbitrary>], iteration_bounds = array<i64: 1, 1, 1>, scalar_prefetch = 1 : i64, scratch_operands = 0 : i64, tpu.core_type = #tpu.core_type<tc>, window_params = [{transform_indices = @transform_0, window_bounds = array<i64: 16, 128>}, {transform_indices = @transform_1, window_bounds = array<i64: 1, 128, 128>}, {transform_indices = @transform_2, window_bounds = array<i64: 1, 1, 128>}, {transform_indices = @transform_3, window_bounds = array<i64: 1, 1, 128>}, {transform_indices = @transform_4, window_bounds = array<i64: 1, 1, 128>}, {transform_indices = @transform_5, window_bounds = array<i64: 16, 128>}, {transform_indices = @transform_6, window_bounds = array<i64: 16, 128>}]} {
    %c0_i32 = arith.constant 0 : i32
    %0 = arith.cmpi eq, %arg2, %c0_i32 : i32
    %1 = arith.extui %0 : i1 to i32
    %c0_i32_0 = arith.constant 0 : i32
    %2 = arith.cmpi ne, %1, %c0_i32_0 : i32
    scf.if %2 {
      %cst_11 = arith.constant 0.000000e+00 : f32
      %13 = vector.broadcast %cst_11 : f32 to vector<16x128xf32>
      %c0_12 = arith.constant 0 : index
      %c0_13 = arith.constant 0 : index
      %14 = vector.load %arg10[%c0_12, %c0_13] : memref<16x128xf32, #tpu.memory_space<vmem>>, vector<16x128xf32>
      tpu.vector_store %arg10[%c0_12, %c0_13], %13 {strides = array<i32>} : memref<16x128xf32, #tpu.memory_space<vmem>>, vector<16x128xf32>,
    } else {
    }
    %c0 = arith.constant 0 : index
    %c0_1 = arith.constant 0 : index
    %3 = vector.load %arg10[%c0, %c0_1] : memref<16x128xf32, #tpu.memory_space<vmem>>, vector<16x128xf32>
    %c0_2 = arith.constant 0 : index
    %c0_3 = arith.constant 0 : index
    %4 = vector.load %arg4[%c0_2, %c0_3] : memref<16x128xbf16, #tpu.memory_space<vmem>>, vector<16x128xbf16>
    %c0_4 = arith.constant 0 : index
    %c0_5 = arith.constant 0 : index
    %c0_6 = arith.constant 0 : index
    %5 = vector.load %arg5[%c0_4, %c0_5, %c0_6] : memref<1x128x128xbf16, #tpu.memory_space<vmem>>, vector<1x128x128xbf16>
    %6 = vector.shape_cast %5 : vector<1x128x128xbf16> to vector<128x128xbf16>
    %cst = arith.constant dense<0.000000e+00> : vector<16x128xf32>
    %7 = tpu.matmul %4, %6, %cst {dimension_numbers = #tpu.dot_dimension_numbers<[1], [0], [0], [1], [0, 0, 1, 1], [], []>} : vector<16x128xbf16>, vector<128x128xbf16>, vector<16x128xf32> -> vector<16x128xf32>
    %8 = arith.addf %3, %7 : vector<16x128xf32>
    %c0_7 = arith.constant 0 : index
    %c0_8 = arith.constant 0 : index
    %9 = vector.load %arg10[%c0_7, %c0_8] : memref<16x128xf32, #tpu.memory_space<vmem>>, vector<16x128xf32>
    tpu.vector_store %arg10[%c0_7, %c0_8], %8 {strides = array<i32>} : memref<16x128xf32, #tpu.memory_space<vmem>>, vector<16x128xf32>,
    %c0_i32_9 = arith.constant 0 : i32
    %10 = arith.cmpi eq, %arg2, %c0_i32_9 : i32
    %11 = arith.extui %10 : i1 to i32
    %c0_i32_10 = arith.constant 0 : i32
    %12 = arith.cmpi ne, %11, %c0_i32_10 : i32
    scf.if %12 {
      %c0_11 = arith.constant 0 : index
      %c0_12 = arith.constant 0 : index
      %13 = vector.load %arg10[%c0_11, %c0_12] : memref<16x128xf32, #tpu.memory_space<vmem>>, vector<16x128xf32>
      %c0_13 = arith.constant 0 : index
      %c0_14 = arith.constant 0 : index
      %c0_15 = arith.constant 0 : index
      %14 = vector.load %arg6[%c0_13, %c0_14, %c0_15] : memref<1x1x128xf32, #tpu.memory_space<vmem>>, vector<1x1x128xf32>
      %15 = vector.shape_cast %14 : vector<1x1x128xf32> to vector<1x128xf32>
      %16 = vector.broadcast %15 : vector<1x128xf32> to vector<16x128xf32>
      %17 = arith.addf %13, %16 : vector<16x128xf32>
      %c0_16 = arith.constant 0 : index
      %c0_17 = arith.constant 0 : index
      %18 = vector.load %arg10[%c0_16, %c0_17] : memref<16x128xf32, #tpu.memory_space<vmem>>, vector<16x128xf32>
      tpu.vector_store %arg10[%c0_16, %c0_17], %17 {strides = array<i32>} : memref<16x128xf32, #tpu.memory_space<vmem>>, vector<16x128xf32>,
      %c0_18 = arith.constant 0 : index
      %c0_19 = arith.constant 0 : index
      %c0_20 = arith.constant 0 : index
      %19 = vector.load %arg7[%c0_18, %c0_19, %c0_20] : memref<1x1x128xf32, #tpu.memory_space<vmem>>, vector<1x1x128xf32>
      %20 = vector.shape_cast %19 : vector<1x1x128xf32> to vector<1x128xf32>
      %21 = vector.broadcast %20 : vector<1x128xf32> to vector<16x128xf32>
      %22 = arith.mulf %17, %21 : vector<16x128xf32>
      %c0_21 = arith.constant 0 : index
      %c0_22 = arith.constant 0 : index
      %c0_23 = arith.constant 0 : index
      %23 = vector.load %arg8[%c0_21, %c0_22, %c0_23] : memref<1x1x128xf32, #tpu.memory_space<vmem>>, vector<1x1x128xf32>
      %24 = vector.shape_cast %23 : vector<1x1x128xf32> to vector<1x128xf32>
      %25 = vector.broadcast %24 : vector<1x128xf32> to vector<16x128xf32>
      %26 = arith.addf %22, %25 : vector<16x128xf32>
      %c0_24 = arith.constant 0 : index
      %c0_25 = arith.constant 0 : index
      %27 = vector.load %arg9[%c0_24, %c0_25] : memref<16x128xf32, #tpu.memory_space<vmem>>, vector<16x128xf32>
      tpu.vector_store %arg9[%c0_24, %c0_25], %26 {strides = array<i32>} : memref<16x128xf32, #tpu.memory_space<vmem>>, vector<16x128xf32>,
    } else {
    }
    return
  }
  func.func @transform_0(%arg0: i32, %arg1: i32, %arg2: i32, %arg3: memref<1xi32, #tpu.memory_space<smem>>) -> (i32, i32) {
    %c0_i32 = arith.constant 0 : i32
    return %arg0, %arg2 : i32, i32
  }
  func.func @transform_1(%arg0: i32, %arg1: i32, %arg2: i32, %arg3: memref<1xi32, #tpu.memory_space<smem>>) -> (i32, i32, i32) {
    %c0 = arith.constant 0 : index
    %0 = memref.load %arg3[%c0] : memref<1xi32, #tpu.memory_space<smem>>
    %c0_i32 = arith.constant 0 : i32
    return %0, %arg2, %arg1 : i32, i32, i32
  }
  func.func @transform_2(%arg0: i32, %arg1: i32, %arg2: i32, %arg3: memref<1xi32, #tpu.memory_space<smem>>) -> (i32, i32, i32) {
    %c0 = arith.constant 0 : index
    %0 = memref.load %arg3[%c0] : memref<1xi32, #tpu.memory_space<smem>>
    %c0_i32 = arith.constant 0 : i32
    %c0_i32_0 = arith.constant 0 : i32
    return %0, %c0_i32, %arg1 : i32, i32, i32
  }
  func.func @transform_3(%arg0: i32, %arg1: i32, %arg2: i32, %arg3: memref<1xi32, #tpu.memory_space<smem>>) -> (i32, i32, i32) {
    %c0 = arith.constant 0 : index
    %0 = memref.load %arg3[%c0] : memref<1xi32, #tpu.memory_space<smem>>
    %c0_i32 = arith.constant 0 : i32
    %c0_i32_0 = arith.constant 0 : i32
    return %0, %c0_i32, %arg1 : i32, i32, i32
  }
  func.func @transform_4(%arg0: i32, %arg1: i32, %arg2: i32, %arg3: memref<1xi32, #tpu.memory_space<smem>>) -> (i32, i32, i32) {
    %c0 = arith.constant 0 : index
    %0 = memref.load %arg3[%c0] : memref<1xi32, #tpu.memory_space<smem>>
    %c0_i32 = arith.constant 0 : i32
    %c0_i32_0 = arith.constant 0 : i32
    return %0, %c0_i32, %arg1 : i32, i32, i32
  }
  func.func @transform_5(%arg0: i32, %arg1: i32, %arg2: i32, %arg3: memref<1xi32, #tpu.memory_space<smem>>) -> (i32, i32) {
    %c0_i32 = arith.constant 0 : i32
    return %arg0, %arg1 : i32, i32
  }
  func.func @transform_6(%arg0: i32, %arg1: i32, %arg2: i32, %arg3: memref<1xi32, #tpu.memory_space<smem>>) -> (i32, i32) {
    %c0_i32 = arith.constant 0 : i32
    return %arg0, %arg1 : i32, i32
  }
}

</mosaic_0001>

<llo_original>
// kernel: popart_forward.1
$region0: #{popart_forward.1}
  #allocation0 [shape = 'u32[]', space=smem, size = 0x4, offset = 0x4, fixed_abs, tag = 'smem constant byte address 0x4 - core index']
  #allocation1 [shape = 'u32[144,128]{1,0:T(1,128)}', space=vmem, size = 0x12000, scoped, tag = 'internal scratch']
  #allocation2 [shape = 's32[1]{0}', space=sflag, size = 0x4, scoped, tag = 'scoped memory for popart_forward.1']
  #allocation3 [shape = 's32[1]{0:T(128)S(6)}', space=smem, size = 0x200, scoped, tag = 'prefetched SMEM operand 0']
  %s0 = inlined_call_operand.<no memory space> [shape: s32[1], index: 0, kind: input, shape index: {}]
  %s1 = inlined_call_operand.vmem [shape: bf16[16,128], index: 1, kind: input, shape index: {}]
  %s2 = inlined_call_operand.hbm [shape: bf16[2,128,128], index: 2, kind: input, shape index: {}]
  %s3 = inlined_call_operand.vmem [shape: f32[2,1,128], index: 3, kind: input, shape index: {}]
  %s4 = inlined_call_operand.vmem [shape: f32[2,1,128], index: 4, kind: input, shape index: {}]
  %s5 = inlined_call_operand.vmem [shape: f32[2,1,128], index: 5, kind: input, shape index: {}]
  %s6 = inlined_call_operand.vmem [shape: f32[16,128], index: 6, kind: output, shape index: {0}]
  %s7 = inlined_call_operand.vmem [shape: f32[16,128], index: 7, kind: output, shape index: {1}]
  %8 = xla_tuple %s6, %s7
  %s9 = sld [smem:[#allocation0]]
  $region50: #{popart_forward.1} parent=0
    _
  %s11 = ssub.s32 1, %s9
  %s12 = scalar_select 0, %s11, %s9
  %13 = sst [smem:[#allocation3]] %s0
  $region1: #{popart_forward.1} parent=0
    #allocation4 [shape = 'u8[32768]{0}', space=vmem, size = 0x8000, scoped, tag = 'input window, operand 2, single buffered']
    #allocation5 [shape = 's32[1]{0}', space=sflag, size = 0x4, scoped, tag = 'scoped memory for popart_forward.1']
    %14 = vsyncpa [#allocation5], 0
    // Predicated region
    $region2: #{popart_forward.1} parent=1 // pred_check
      _
    $region3: #{popart_forward.1} parent=1 // pred_check_branch
      %16 = sbr.rel (0) target = $region5
    $region4: #{popart_forward.1} parent=1 // pred_region
      _
    $region5: #{popart_forward.1} parent=1 // pred_fallthru
      _
    // Predicated region
    $region6: #{popart_forward.1} parent=1 // pred_check
      _
    $region7: #{popart_forward.1} parent=1 // pred_check_branch
      %18 = sbr.rel (0) target = $region9
    $region8: #{popart_forward.1} parent=1 // pred_region
      %s19 = sld [smem:[#allocation3]]
      %s21 = ssub.s32 1024, 1024
      %22 = vsyncadd [#allocation5], %s21
      %s23 = smul.addr %s19, 16
      %s24 = smul.addr %s23, 64
      %s25 = scalar_lea.hbm %s2, %s24
      %s26 = sshll.u32 [#allocation4], 4
      %s27 = int_to_ptr.vmem [resolvable:$true] %s26
      %32 = dma.hbm_to_vmem [thread:$0]  %s25, 1024, %s27, [#allocation5], 64, 64, 4
    $region9: #{popart_forward.1} parent=1 // pred_fallthru
      _
    // Predicated region
    $region10: #{popart_forward.1} parent=1 // pred_check
      _
    $region11: #{popart_forward.1} parent=1 // pred_check_branch
      %34 = sbr.rel (0) target = $region13
    $region12: #{popart_forward.1} parent=1 // pred_region
      %s35 = sld [smem:[#allocation3]]
      %p36 = scmp.lt.s32.totalorder %s35, 1
      %s37 = scalar_select %p36, %s35, 1
      %s38 = scalar_lea.vmem %s3, %s37
      %s39 = sld [smem:[#allocation3]]
    $region13: #{popart_forward.1} parent=1 // pred_fallthru
      _
    // Predicated region
    $region14: #{popart_forward.1} parent=1 // pred_check
      _
    $region15: #{popart_forward.1} parent=1 // pred_check_branch
      %41 = sbr.rel (0) target = $region17
    $region16: #{popart_forward.1} parent=1 // pred_region
      %s42 = sld [smem:[#allocation3]]
      %p43 = scmp.lt.s32.totalorder %s42, 1
      %s44 = scalar_select %p43, %s42, 1
      %s45 = scalar_lea.vmem %s4, %s44
      %s46 = sld [smem:[#allocation3]]
    $region17: #{popart_forward.1} parent=1 // pred_fallthru
      _
    // Predicated region
    $region18: #{popart_forward.1} parent=1 // pred_check
      _
    $region19: #{popart_forward.1} parent=1 // pred_check_branch
      %48 = sbr.rel (0) target = $region21
    $region20: #{popart_forward.1} parent=1 // pred_region
      %s49 = sld [smem:[#allocation3]]
      %p50 = scmp.lt.s32.totalorder %s49, 1
      %s51 = scalar_select %p50, %s49, 1
      %s52 = scalar_lea.vmem %s5, %s51
      %s53 = sld [smem:[#allocation3]]
    $region21: #{popart_forward.1} parent=1 // pred_fallthru
      _
    // Predicated region
    $region22: #{popart_forward.1} parent=1 // pred_check
      _
    $region23: #{popart_forward.1} parent=1 // pred_check_branch
      %55 = sbr.rel (0) target = $region25
    $region24: #{popart_forward.1} parent=1 // pred_region
      %56 = dma.done [#allocation5], 1024
    $region25: #{popart_forward.1} parent=1 // pred_fallthru
      _
    %s57 = sld [smem:[#allocation3]]
    %p58 = scmp.lt.s32.totalorder %s57, 1
    %s59 = scalar_select %p58, %s57, 1
    %s60 = scalar_lea.vmem %s3, %s59
    %s61 = sld [smem:[#allocation3]]
    %p62 = scmp.lt.s32.totalorder %s61, 1
    %s63 = scalar_select %p62, %s61, 1
    %s64 = scalar_lea.vmem %s4, %s63
    %s65 = sld [smem:[#allocation3]]
    %p66 = scmp.lt.s32.totalorder %s65, 1
    %s67 = scalar_select %p66, %s65, 1
    %s68 = scalar_lea.vmem %s5, %s67
    %s69 = sld [smem:[#allocation3]]
    %s70 = sld [smem:[#allocation3]]
    %p71 = scmp.lt.s32.totalorder %s70, 1
    %s72 = scalar_select %p71, %s70, 1
    %s73 = scalar_lea.vmem %s3, %s72
    %s74 = sld [smem:[#allocation3]]
    %s75 = sld [smem:[#allocation3]]
    %p76 = scmp.lt.s32.totalorder %s75, 1
    %s77 = scalar_select %p76, %s75, 1
    %s78 = scalar_lea.vmem %s4, %s77
    %s79 = sld [smem:[#allocation3]]
    %s80 = sld [smem:[#allocation3]]
    %p81 = scmp.lt.s32.totalorder %s80, 1
    %s82 = scalar_select %p81, %s80, 1
    %s83 = scalar_lea.vmem %s5, %s82
    %s84 = sld [smem:[#allocation3]]
    %p86 = scmp.eq.s32.totalorder 0, 0
    // Predicated region
    $region26: #{popart_forward.1} parent=1 // pred_check
      %p87 = pneg %p86
    $region27: #{popart_forward.1} parent=1 // pred_check_branch
      %89 = sbr.rel (%p87) target = $region29
    $region28: #{popart_forward.1} parent=1 // pred_region
      %90 = vst [vmem:[%s7] sm:$0xff] 0.0
      %91 = vst [vmem:[%s7 + $0x8] sm:$0xff] 0.0
    $region29: #{popart_forward.1} parent=1 // pred_fallthru
      _
    %v92 = vld [vmem:[%s7] sm:$0xff]
    %v93 = vld [vmem:[%s7 + $0x8] sm:$0xff]
    %v94 = vld [vmem:[%s1] sm:$0xf]
    %v95 = vld [vmem:[%s1 + $0x4] sm:$0xf]
    %v96 = vld [vmem:[#allocation4] sm:$0xf]
    %v97 = vld [vmem:[#allocation4 + $0x4] sm:$0xf]
    %v98 = vld [vmem:[#allocation4 + $0x8] sm:$0xf]
    %v99 = vld [vmem:[#allocation4 + $0xc] sm:$0xf]
    %v100 = vld [vmem:[#allocation4 + $0x10] sm:$0xf]
    %v101 = vld [vmem:[#allocation4 + $0x14] sm:$0xf]
    %v102 = vld [vmem:[#allocation4 + $0x18] sm:$0xf]
    %v103 = vld [vmem:[#allocation4 + $0x1c] sm:$0xf]
    %v104 = vld [vmem:[#allocation4 + $0x20] sm:$0xf]
    %v105 = vld [vmem:[#allocation4 + $0x24] sm:$0xf]
    %v106 = vld [vmem:[#allocation4 + $0x28] sm:$0xf]
    %v107 = vld [vmem:[#allocation4 + $0x2c] sm:$0xf]
    %v108 = vld [vmem:[#allocation4 + $0x30] sm:$0xf]
    %v109 = vld [vmem:[#allocation4 + $0x34] sm:$0xf]
    %v110 = vld [vmem:[#allocation4 + $0x38] sm:$0xf]
    %v111 = vld [vmem:[#allocation4 + $0x3c] sm:$0xf]
    %v114 = vunpack.c.l.b16 %v94
    %v115 = vunpack.c.l.b16 %v95
    %v116 = vpack.c.b16 %v115, %v114
    %v134 = vunpack.c.l.b16 %v96
    %v135 = vunpack.c.l.b16 %v97
    %v136 = vunpack.c.l.b16 %v98
    %v137 = vunpack.c.l.b16 %v99
    %v138 = vunpack.c.l.b16 %v100
    %v139 = vunpack.c.l.b16 %v101
    %v140 = vunpack.c.l.b16 %v102
    %v141 = vunpack.c.l.b16 %v103
    %v142 = vunpack.c.l.b16 %v104
    %v143 = vunpack.c.l.b16 %v105
    %v144 = vunpack.c.l.b16 %v106
    %v145 = vunpack.c.l.b16 %v107
    %v146 = vunpack.c.l.b16 %v108
    %v147 = vunpack.c.l.b16 %v109
    %v148 = vunpack.c.l.b16 %v110
    %v149 = vunpack.c.l.b16 %v111
    %v150 = vpack.c.b16 %v135, %v134
    %v151 = vpack.c.b16 %v137, %v136
    %v152 = vpack.c.b16 %v139, %v138
    %v153 = vpack.c.b16 %v141, %v140
    %v154 = vpack.c.b16 %v143, %v142
    %v155 = vpack.c.b16 %v145, %v144
    %v156 = vpack.c.b16 %v147, %v146
    %v157 = vpack.c.b16 %v149, %v148
    %166 = vmatprep.subr.bf16.mxu0 0
    %167 = vmatpush1.bf16.msra.mxu0 %v150
    %168 = vmatprep.subr.bf16.mxu0 0
    %169 = vmatpush1.bf16.msra.mxu0 %v151
    %170 = vmatprep.subr.bf16.mxu0 0
    %171 = vmatpush1.bf16.msra.mxu0 %v152
    %172 = vmatprep.subr.bf16.mxu0 0
    %173 = vmatpush1.bf16.msra.mxu0 %v153
    %174 = vmatprep.subr.bf16.mxu0 0
    %175 = vmatpush1.bf16.msra.mxu0 %v154
    %176 = vmatprep.subr.bf16.mxu0 0
    %177 = vmatpush1.bf16.msra.mxu0 %v155
    %178 = vmatprep.subr.bf16.mxu0 0
    %179 = vmatpush1.bf16.msra.mxu0 %v156
    %180 = vmatprep.subr.bf16.mxu0 0
    %181 = vmatpush1.bf16.msra.mxu0 %v157
    %182 = vmatprep.subr.bf16.mxu0 0
    %183 = vmatpush1.bf16.msra.mxu0 0
    %184 = vmatprep.subr.bf16.mxu0 0
    %185 = vmatpush1.bf16.msra.mxu0 0
    %186 = vmatprep.subr.bf16.mxu0 0
    %187 = vmatpush1.bf16.msra.mxu0 0
    %188 = vmatprep.subr.bf16.mxu0 0
    %189 = vmatpush1.bf16.msra.mxu0 0
    %190 = vmatprep.subr.bf16.mxu0 0
    %191 = vmatpush1.bf16.msra.mxu0 0
    %192 = vmatprep.subr.bf16.mxu0 0
    %193 = vmatpush1.bf16.msra.mxu0 0
    %194 = vmatprep.subr.bf16.mxu0 0
    %195 = vmatpush1.bf16.msra.mxu0 0
    %196 = vmatprep.subr.bf16.mxu0 0
    %197 = vmatpush1.bf16.msra.mxu0 0
    %198 = vmatprep.mubr.bf16.mxu0 0
    %199 = vmatmul.mubr.bf16.gmra.mrb[0].mxu0 %v116
    %v200 = vpop.f32.mrb[0].mxu0
    %v201 = vadd.f32 0.0, %v200
    %v202 = vpop.f32.mrb[0].mxu0
    %v203 = vpop.f32.mrb[0].mxu0
    %v204 = vadd.f32 0.0, %v203
    %v205 = vpop.f32.mrb[0].mxu0
    %206 = vdwg.mxu0
    %v207 = vadd.f32 %v92, %v201
    %v208 = vadd.f32 %v93, %v204
    %209 = vst [vmem:[%s7] sm:$0xff] %v207
    %210 = vst [vmem:[%s7 + $0x8] sm:$0xff] %v208
    // Predicated region
    $region30: #{popart_forward.1} parent=1 // pred_check
      %p211 = pneg %p86
    $region31: #{popart_forward.1} parent=1 // pred_check_branch
      %213 = sbr.rel (%p211) target = $region33
    $region32: #{popart_forward.1} parent=1 // pred_region
      %v214 = vld [vmem:[%s7] sm:$0xff]
      %v215 = vld [vmem:[%s7 + $0x8] sm:$0xff]
      %v216 = vld [vmem:[%s73] sm:$0x1]
      %v218 = vlaneseq
      %v219 = vshrl.u32 %v218, 7
      %v220 = vsub.s32 0, %v219
      %v221 = vrot.slane %v216, %v220
      %v223 = vadd.f32 %v214, %v221
      %v224 = vadd.f32 %v215, %v221
      %225 = vst [vmem:[%s7] sm:$0xff] %v223
      %226 = vst [vmem:[%s7 + $0x8] sm:$0xff] %v224
      %v227 = vld [vmem:[%s78] sm:$0x1]
      %v229 = vlaneseq
      %v230 = vshrl.u32 %v229, 7
      %v231 = vsub.s32 0, %v230
      %v232 = vrot.slane %v227, %v231
      %v234 = vmul.f32 %v223, %v232
      %v235 = vmul.f32 %v224, %v232
      %v236 = vld [vmem:[%s83] sm:$0x1]
      %v238 = vlaneseq
      %v239 = vshrl.u32 %v238, 7
      %v240 = vsub.s32 0, %v239
      %v241 = vrot.slane %v236, %v240
      %v243 = vadd.f32 %v234, %v241
      %v244 = vadd.f32 %v235, %v241
      %245 = vst [vmem:[%s6] sm:$0xff] %v243
      %246 = vst [vmem:[%s6 + $0x8] sm:$0xff] %v244
    $region33: #{popart_forward.1} parent=1 // pred_fallthru
      _
    // Predicated region
    $region34: #{popart_forward.1} parent=1 // pred_check
      _
    $region35: #{popart_forward.1} parent=1 // pred_check_branch
      %248 = sbr.rel (0) target = $region37
    $region36: #{popart_forward.1} parent=1 // pred_region
      _
    $region37: #{popart_forward.1} parent=1 // pred_fallthru
      _
    // Predicated region
    $region38: #{popart_forward.1} parent=1 // pred_check
      _
    $region39: #{popart_forward.1} parent=1 // pred_check_branch
      %250 = sbr.rel (0) target = $region41
    $region40: #{popart_forward.1} parent=1 // pred_region
      _
    $region41: #{popart_forward.1} parent=1 // pred_fallthru
      _
    // Predicated region
    $region42: #{popart_forward.1} parent=1 // pred_check
      _
    $region43: #{popart_forward.1} parent=1 // pred_check_branch
      %252 = sbr.rel (0) target = $region45
    $region44: #{popart_forward.1} parent=1 // pred_region
      _
    $region45: #{popart_forward.1} parent=1 // pred_fallthru
      _
    // Predicated region
    $region46: #{popart_forward.1} parent=1 // pred_check
      _
    $region47: #{popart_forward.1} parent=1 // pred_check_branch
      %254 = sbr.rel (0) target = $region49
    $region48: #{popart_forward.1} parent=1 // pred_region
      _
    $region49: #{popart_forward.1} parent=1 // pred_fallthru
      _
    %255 = vsyncpa [#allocation5], 1

</llo_original>
